<compile_context>
chip_gen: v7x
topology: tpu7x:2x2x1
jax: 0.10.0
libtpu: 0.0.40
codegen_flags: <defaults>
</compile_context>

<pallas_src>
import jax
import jax.numpy as jnp
from jax.experimental import pallas as pl
from jax.experimental.pallas import tpu as pltpu


def worker_kernel(
    # inputs
    xh_ref,                      # [B, S+H]   concat(x, hx)
    cx_ref,                      # [B, H]
    goals_ref,                   # [B, T*d]   goals flattened over (T, d)
    w_gate_ref, b_gate_ref,      # [S+H, 4H], [1, 4H]   fused percep + LSTM gates
    w_crit_ref, b_crit_ref,      # [H, 2H],   [1, 2H]   fused critic hidden layers
    w_goal_ref,                  # [T*d, H]   fc weight x K-replication, tiled over T
    w_head_ref, b_head_ref,      # [3H, A+2], [1, A+2]  block-diag(sel, w_c1o, w_c2o)
    # outputs
    hc_ref,                      # [B, 2H]    (h_new | c_new)
    pv_ref,                      # [B, A+2]   (policy | v_ext | v_int)
):
    f32 = jnp.float32
    H = cx_ref.shape[1]          # num_actions * k
    A = pv_ref.shape[1] - 2      # num_actions

    # ---- fused percep + LSTMCell gates: one matmul ----
    gates = (jnp.dot(xh_ref[...], w_gate_ref[...], preferred_element_type=f32)
             + b_gate_ref[...])                              # [B, 4H], gate order i,f,g,o
    i_g = jax.nn.sigmoid(gates[:, 0 * H:1 * H])
    f_g = jax.nn.sigmoid(gates[:, 1 * H:2 * H])
    g_g = jnp.tanh(gates[:, 2 * H:3 * H])
    o_g = jax.nn.sigmoid(gates[:, 3 * H:4 * H])
    c_new = f_g * cx_ref[...] + i_g * g_g
    h_new = o_g * jnp.tanh(c_new)
    hc_ref[:, :H] = h_new
    hc_ref[:, H:] = c_new

    # ---- fused critics (hidden layers): one relu'd matmul ----
    v = jnp.maximum(
        jnp.dot(h_new, w_crit_ref[...], preferred_element_type=f32) + b_crit_ref[...],
        0.0)                                                  # [B, 2H]

    # ---- goal path: T-sum + fc + K-replication folded into one matmul ----
    goal_tiled = jnp.dot(goals_ref[...], w_goal_ref[...],
                         preferred_element_type=f32)          # [B, H]

    # ---- fused output head: policy logits + both critic outputs ----
    left = jnp.concatenate([h_new * goal_tiled, v], axis=1)   # [B, 3H] (128-aligned concat)
    out = (jnp.dot(left, w_head_ref[...], preferred_element_type=f32)
           + b_head_ref[...])                                 # [B, A+2]

    # softmax over the first A lanes
    logits = out[:, :A]
    m = jnp.max(logits, axis=-1, keepdims=True)
    e = jnp.exp(logits - m)
    policy = e / jnp.sum(e, axis=-1, keepdims=True)

    pv_ref[...] = out
    pv_ref[:, :A] = policy


def fold_params(params, T):
    """Host-side algebraic folding of the original module parameters."""
    f32 = jnp.float32
    A = params["num_actions"]
    H = params["w_hh"].shape[0]           # num_actions * k
    K = params["w_fc"].shape[1]           # k

    # percep folded into LSTM input-to-hidden weights; single fused gate matmul
    w_x = params["w_percep"] @ params["w_ih"]                              # [S, 4H]
    w_gate = jnp.concatenate([w_x, params["w_hh"]], axis=0)                # [S+H, 4H]
    b_gate = params["b_percep"] @ params["w_ih"] + params["b_ih"] + params["b_hh"]

    # fused critic hidden layers
    w_crit = jnp.concatenate([params["w_c1"], params["w_c2"]], axis=1)     # [H, 2H]
    b_crit = jnp.concatenate([params["b_c1"], params["b_c2"]], axis=1)     # [1, 2H]

    # goal path: (sum_t goals_t) @ w_fc, replicated over each K-group
    #   == goals_flat @ tile(w_fc @ rep, (T, 1))
    rep = (jnp.arange(K)[:, None] == (jnp.arange(H)[None, :] % K)).astype(f32)  # [K, H]
    w_fc_rep = params["w_fc"] @ rep                                              # [d, H]
    w_goal = jnp.tile(w_fc_rep, (T, 1))                                          # [T*d, H]

    # fused output head: block-diag(sel, w_c1o, w_c2o) and packed bias
    sel = (jnp.arange(H)[:, None] // K == jnp.arange(A)[None, :]).astype(f32)    # [H, A]
    w_head = jnp.zeros((3 * H, A + 2), f32)
    w_head = w_head.at[0:H, 0:A].set(sel)
    w_head = w_head.at[H:2 * H, A].set(params["w_c1o"][:, 0])
    w_head = w_head.at[2 * H:3 * H, A + 1].set(params["w_c2o"][:, 0])
    b_head = jnp.concatenate(
        [jnp.zeros((1, A), f32), params["b_c1o"], params["b_c2o"]], axis=1)      # [1, A+2]

    return {
        "num_actions": A,
        "w_gate": w_gate, "b_gate": b_gate,
        "w_crit": w_crit, "b_crit": b_crit,
        "w_goal": w_goal,
        "w_head": w_head, "b_head": b_head,
    }


def worker_forward(x, hx, cx, goals, folded):
    B = x.shape[0]
    H = cx.shape[1]
    A = folded["num_actions"]

    xh = jnp.concatenate([x, hx], axis=1)          # [B, S+H]
    goals_flat = goals.reshape(B, -1)              # [B, T*d]

    inputs = (
        xh, cx, goals_flat,
        folded["w_gate"], folded["b_gate"],
        folded["w_crit"], folded["b_crit"],
        folded["w_goal"],
        folded["w_head"], folded["b_head"],
    )
    vmem = pl.BlockSpec(memory_space=pltpu.MemorySpace.VMEM)

    out_shape = (
        jax.ShapeDtypeStruct((B, 2 * H), jnp.float32),   # (h_new | c_new)
        jax.ShapeDtypeStruct((B, A + 2), jnp.float32),   # (policy | v_ext | v_int)
    )

    hc, pv = pl.pallas_call(
        worker_kernel,
        out_shape=out_shape,
        in_specs=[vmem] * len(inputs),
        out_specs=(vmem, vmem),
    )(*inputs)

    h_new = hc[:, :H]
    c_new = hc[:, H:]
    policy = pv[:, :A]
    v_ext = pv[:, A:A + 1]
    v_int = pv[:, A + 1:A + 2]
    return policy, (h_new, c_new), v_ext, v_int


def make_params(key, num_actions, num_state, k, d):
    """Deterministic synthetic parameters (kaiming-ish normals, zero biases for LSTM)."""
    H = num_actions * k
    keys = jax.random.split(key, 16)

    def kaiming(key, fan_out, shape):
        # kaiming_normal_(mode='fan_out', nonlinearity='relu'): std = sqrt(2 / fan_out)
        return (jnp.sqrt(2.0 / fan_out) * jax.random.normal(key, shape)).astype(jnp.float32)

    params = {
        "num_actions": num_actions,
        # percep: Linear(num_state, d)  -> stored transposed [in, out]
        "w_percep": kaiming(keys[0], d, (num_state, d)),
        "b_percep": jnp.zeros((1, d), jnp.float32),
        # LSTMCell(d, H): W_ih [4H, d], W_hh [4H, H] -> transposed; biases zeroed (as in module)
        "w_ih": (0.1 * jax.random.normal(keys[1], (d, 4 * H))).astype(jnp.float32),
        "w_hh": (0.1 * jax.random.normal(keys[2], (H, 4 * H))).astype(jnp.float32),
        "b_ih": jnp.zeros((1, 4 * H), jnp.float32),
        "b_hh": jnp.zeros((1, 4 * H), jnp.float32),
        # fc: Linear(d, k, bias=False)
        "w_fc": kaiming(keys[3], k, (d, k)),
        # critic 1
        "w_c1": kaiming(keys[4], H, (H, H)),
        "b_c1": jnp.zeros((1, H), jnp.float32),
        "w_c1o": kaiming(keys[5], 1, (H, 1)),
        "b_c1o": jnp.zeros((1, 1), jnp.float32),
        # critic 2
        "w_c2": kaiming(keys[6], H, (H, H)),
        "b_c2": jnp.zeros((1, H), jnp.float32),
        "w_c2o": kaiming(keys[7], 1, (H, 1)),
        "b_c2o": jnp.zeros((1, 1), jnp.float32),
    }
    return params


def worker_forward_ref(x, hx, cx, goals, params):
    """Pure-JAX reference (mirrors the PyTorch forward, un-folded params)."""
    H = hx.shape[1]
    A = params["num_actions"]
    K = params["w_fc"].shape[1]

    xp = x @ params["w_percep"] + params["b_percep"]
    gates = xp @ params["w_ih"] + params["b_ih"] + hx @ params["w_hh"] + params["b_hh"]
    i = jax.nn.sigmoid(gates[:, 0 * H:1 * H])
    f = jax.nn.sigmoid(gates[:, 1 * H:2 * H])
    g = jnp.tanh(gates[:, 2 * H:3 * H])
    o = jax.nn.sigmoid(gates[:, 3 * H:4 * H])
    c_new = f * cx + i * g
    h_new = o * jnp.tanh(c_new)

    v1 = jax.nn.relu(h_new @ params["w_c1"] + params["b_c1"])
    v_ext = v1 @ params["w_c1o"] + params["b_c1o"]
    v2 = jax.nn.relu(h_new @ params["w_c2"] + params["b_c2"])
    v_int = v2 @ params["w_c2o"] + params["b_c2o"]

    goal_embed = goals.sum(axis=1) @ params["w_fc"]                 # [B, K]
    worker_embed = h_new.reshape(h_new.shape[0], A, K)              # [B, A, K]
    logits = jnp.einsum("bak,bk->ba", worker_embed, goal_embed)
    policy = jax.nn.softmax(logits, axis=-1)
    return policy, (h_new, c_new), v_ext, v_int


if __name__ == "__main__":
    # Small, hardware-friendly sizes: H = num_actions * k = 128 lanes.
    B, num_state, d = 8, 32, 64
    num_actions, k = 8, 16
    T = 4  # goal horizon (goals summed over dim=1)

    key = jax.random.PRNGKey(0)
    kx, kh, kc, kg, kp = jax.random.split(key, 5)

    x = jax.random.normal(kx, (B, num_state), jnp.float32)
    hx = jax.random.normal(kh, (B, num_actions * k), jnp.float32)
    cx = jax.random.normal(kc, (B, num_actions * k), jnp.float32)
    goals = jax.random.normal(kg, (B, T, d), jnp.float32)

    params = make_params(kp, num_actions, num_state, k, d)
    folded = fold_params(params, T)

    policy, (hx_new, cx_new), v_ext, v_int = worker_forward(x, hx, cx, goals, folded)
    jax.block_until_ready((policy, hx_new, cx_new, v_ext, v_int))

    # Correctness check against pure-JAX reference on the original parameters.
    pr, (hr, cr), ver, vir = worker_forward_ref(x, hx, cx, goals, params)
    for got, want in ((policy, pr), (hx_new, hr), (cx_new, cr), (v_ext, ver), (v_int, vir)):
        assert jnp.allclose(got, want, rtol=1e-4, atol=1e-4), "mismatch vs reference"

    print("KERNEL_OK")
</pallas_src>

<mosaic_0001>
module attributes {stable_mosaic.version = 11 : i64} {
  func.func @worker_kernel(%arg0: memref<8x160xf32, #tpu.memory_space<vmem>>, %arg1: memref<8x128xf32, #tpu.memory_space<vmem>>, %arg2: memref<8x256xf32, #tpu.memory_space<vmem>>, %arg3: memref<160x512xf32, #tpu.memory_space<vmem>>, %arg4: memref<1x512xf32, #tpu.memory_space<vmem>>, %arg5: memref<128x256xf32, #tpu.memory_space<vmem>>, %arg6: memref<1x256xf32, #tpu.memory_space<vmem>>, %arg7: memref<256x128xf32, #tpu.memory_space<vmem>>, %arg8: memref<384x10xf32, #tpu.memory_space<vmem>>, %arg9: memref<1x10xf32, #tpu.memory_space<vmem>>, %arg10: memref<8x256xf32, #tpu.memory_space<vmem>>, %arg11: memref<8x10xf32, #tpu.memory_space<vmem>>) attributes {dimension_semantics = [], scalar_prefetch = 0 : i64, scratch_operands = 0 : i64, tpu.core_type = #tpu.core_type<tc>} {
    %c0 = arith.constant 0 : index
    %c0_0 = arith.constant 0 : index
    %0 = vector.load %arg0[%c0, %c0_0] : memref<8x160xf32, #tpu.memory_space<vmem>>, vector<8x160xf32>
    %c0_1 = arith.constant 0 : index
    %c0_2 = arith.constant 0 : index
    %1 = vector.load %arg3[%c0_1, %c0_2] : memref<160x512xf32, #tpu.memory_space<vmem>>, vector<160x512xf32>
    %cst = arith.constant dense<0.000000e+00> : vector<8x512xf32>
    %2 = tpu.matmul %0, %1, %cst {dimension_numbers = #tpu.dot_dimension_numbers<[1], [0], [0], [1], [0, 0, 1, 1], [], []>} : vector<8x160xf32>, vector<160x512xf32>, vector<8x512xf32> -> vector<8x512xf32>
    %c0_3 = arith.constant 0 : index
    %c0_4 = arith.constant 0 : index
    %3 = vector.load %arg4[%c0_3, %c0_4] : memref<1x512xf32, #tpu.memory_space<vmem>>, vector<1x512xf32>
    %4 = vector.broadcast %3 : vector<1x512xf32> to vector<8x512xf32>
    %5 = arith.addf %2, %4 : vector<8x512xf32>
    %6 = vector.extract_strided_slice %5 {offsets = [0, 0], sizes = [8, 128], strides = [1, 1]} : vector<8x512xf32> to vector<8x128xf32>
    %7 = arith.negf %6 : vector<8x128xf32>
    %8 = math.exp %7 : vector<8x128xf32>
    %cst_5 = arith.constant 1.000000e+00 : f32
    %9 = vector.broadcast %cst_5 : f32 to vector<8x128xf32>
    %10 = arith.addf %9, %8 : vector<8x128xf32>
    %11 = arith.divf %9, %10 : vector<8x128xf32>
    %12 = vector.extract_strided_slice %5 {offsets = [0, 128], sizes = [8, 128], strides = [1, 1]} : vector<8x512xf32> to vector<8x128xf32>
    %13 = arith.negf %12 : vector<8x128xf32>
    %14 = math.exp %13 : vector<8x128xf32>
    %cst_6 = arith.constant 1.000000e+00 : f32
    %15 = vector.broadcast %cst_6 : f32 to vector<8x128xf32>
    %16 = arith.addf %15, %14 : vector<8x128xf32>
    %17 = arith.divf %15, %16 : vector<8x128xf32>
    %18 = vector.extract_strided_slice %5 {offsets = [0, 256], sizes = [8, 128], strides = [1, 1]} : vector<8x512xf32> to vector<8x128xf32>
    %19 = math.tanh %18 : vector<8x128xf32>
    %20 = vector.extract_strided_slice %5 {offsets = [0, 384], sizes = [8, 128], strides = [1, 1]} : vector<8x512xf32> to vector<8x128xf32>
    %21 = arith.negf %20 : vector<8x128xf32>
    %22 = math.exp %21 : vector<8x128xf32>
    %cst_7 = arith.constant 1.000000e+00 : f32
    %23 = vector.broadcast %cst_7 : f32 to vector<8x128xf32>
    %24 = arith.addf %23, %22 : vector<8x128xf32>
    %25 = arith.divf %23, %24 : vector<8x128xf32>
    %c0_8 = arith.constant 0 : index
    %c0_9 = arith.constant 0 : index
    %26 = vector.load %arg1[%c0_8, %c0_9] : memref<8x128xf32, #tpu.memory_space<vmem>>, vector<8x128xf32>
    %27 = arith.mulf %17, %26 : vector<8x128xf32>
    %28 = arith.mulf %11, %19 : vector<8x128xf32>
    %29 = arith.addf %27, %28 : vector<8x128xf32>
    %30 = math.tanh %29 : vector<8x128xf32>
    %31 = arith.mulf %25, %30 : vector<8x128xf32>
    %c0_10 = arith.constant 0 : index
    %c0_11 = arith.constant 0 : index
    %32 = vector.load %arg10[%c0_10, %c0_11] : memref<8x256xf32, #tpu.memory_space<vmem>>, vector<8x128xf32>
    tpu.vector_store %arg10[%c0_10, %c0_11], %31 {strides = array<i32>} : memref<8x256xf32, #tpu.memory_space<vmem>>, vector<8x128xf32>,
    %c0_12 = arith.constant 0 : index
    %c128 = arith.constant 128 : index
    %33 = vector.load %arg10[%c0_12, %c128] : memref<8x256xf32, #tpu.memory_space<vmem>>, vector<8x128xf32>
    tpu.vector_store %arg10[%c0_12, %c128], %29 {strides = array<i32>} : memref<8x256xf32, #tpu.memory_space<vmem>>, vector<8x128xf32>,
    %c0_13 = arith.constant 0 : index
    %c0_14 = arith.constant 0 : index
    %34 = vector.load %arg5[%c0_13, %c0_14] : memref<128x256xf32, #tpu.memory_space<vmem>>, vector<128x256xf32>
    %cst_15 = arith.constant dense<0.000000e+00> : vector<8x256xf32>
    %35 = tpu.matmul %31, %34, %cst_15 {dimension_numbers = #tpu.dot_dimension_numbers<[1], [0], [0], [1], [0, 0, 1, 1], [], []>} : vector<8x128xf32>, vector<128x256xf32>, vector<8x256xf32> -> vector<8x256xf32>
    %c0_16 = arith.constant 0 : index
    %c0_17 = arith.constant 0 : index
    %36 = vector.load %arg6[%c0_16, %c0_17] : memref<1x256xf32, #tpu.memory_space<vmem>>, vector<1x256xf32>
    %37 = vector.broadcast %36 : vector<1x256xf32> to vector<8x256xf32>
    %38 = arith.addf %35, %37 : vector<8x256xf32>
    %cst_18 = arith.constant 0.000000e+00 : f32
    %39 = vector.broadcast %cst_18 : f32 to vector<8x256xf32>
    %40 = arith.maximumf %38, %39 : vector<8x256xf32>
    %c0_19 = arith.constant 0 : index
    %c0_20 = arith.constant 0 : index
    %41 = vector.load %arg2[%c0_19, %c0_20] : memref<8x256xf32, #tpu.memory_space<vmem>>, vector<8x256xf32>
    %c0_21 = arith.constant 0 : index
    %c0_22 = arith.constant 0 : index
    %42 = vector.load %arg7[%c0_21, %c0_22] : memref<256x128xf32, #tpu.memory_space<vmem>>, vector<256x128xf32>
    %cst_23 = arith.constant dense<0.000000e+00> : vector<8x128xf32>
    %43 = tpu.matmul %41, %42, %cst_23 {dimension_numbers = #tpu.dot_dimension_numbers<[1], [0], [0], [1], [0, 0, 1, 1], [], []>} : vector<8x256xf32>, vector<256x128xf32>, vector<8x128xf32> -> vector<8x128xf32>
    %44 = arith.mulf %31, %43 : vector<8x128xf32>
    %45 = tpu.concatenate %44, %40 in 1 : vector<8x128xf32>, vector<8x256xf32> -> vector<8x384xf32>
    %c0_24 = arith.constant 0 : index
    %c0_25 = arith.constant 0 : index
    %46 = vector.load %arg8[%c0_24, %c0_25] : memref<384x10xf32, #tpu.memory_space<vmem>>, vector<384x10xf32>
    %cst_26 = arith.constant dense<0.000000e+00> : vector<8x10xf32>
    %47 = tpu.matmul %45, %46, %cst_26 {dimension_numbers = #tpu.dot_dimension_numbers<[1], [0], [0], [1], [0, 0, 1, 1], [], []>} : vector<8x384xf32>, vector<384x10xf32>, vector<8x10xf32> -> vector<8x10xf32>
    %c0_27 = arith.constant 0 : index
    %c0_28 = arith.constant 0 : index
    %48 = vector.load %arg9[%c0_27, %c0_28] : memref<1x10xf32, #tpu.memory_space<vmem>>, vector<1x10xf32>
    %49 = vector.broadcast %48 : vector<1x10xf32> to vector<8x10xf32>
    %50 = arith.addf %47, %49 : vector<8x10xf32>
    %51 = vector.extract_strided_slice %50 {offsets = [0, 0], sizes = [8, 8], strides = [1, 1]} : vector<8x10xf32> to vector<8x8xf32>
    %cst_29 = arith.constant dense<0xFF800000> : vector<8xf32>
    %52 = vector.multi_reduction <maximumf>, %51, %cst_29 [1] : vector<8x8xf32> to vector<8xf32>
    %53 = vector.shape_cast %52 : vector<8xf32> to vector<8x1xf32>
    %54 = vector.broadcast %53 : vector<8x1xf32> to vector<8x8xf32>
    %55 = arith.subf %51, %54 : vector<8x8xf32>
    %56 = math.exp %55 : vector<8x8xf32>
    %cst_30 = arith.constant dense<0.000000e+00> : vector<8xf32>
    %57 = vector.multi_reduction <add>, %56, %cst_30 [1] : vector<8x8xf32> to vector<8xf32>
    %58 = vector.shape_cast %57 : vector<8xf32> to vector<8x1xf32>
    %59 = vector.broadcast %58 : vector<8x1xf32> to vector<8x8xf32>
    %60 = arith.divf %56, %59 : vector<8x8xf32>
    %c0_31 = arith.constant 0 : index
    %c0_32 = arith.constant 0 : index
    %61 = vector.load %arg11[%c0_31, %c0_32] : memref<8x10xf32, #tpu.memory_space<vmem>>, vector<8x10xf32>
    tpu.vector_store %arg11[%c0_31, %c0_32], %50 {strides = array<i32>} : memref<8x10xf32, #tpu.memory_space<vmem>>, vector<8x10xf32>,
    %c0_33 = arith.constant 0 : index
    %c0_34 = arith.constant 0 : index
    %62 = vector.load %arg11[%c0_33, %c0_34] : memref<8x10xf32, #tpu.memory_space<vmem>>, vector<8x8xf32>
    tpu.vector_store %arg11[%c0_33, %c0_34], %60 {strides = array<i32>} : memref<8x10xf32, #tpu.memory_space<vmem>>, vector<8x8xf32>,
    return
  }
}

</mosaic_0001>

<llo_original>
// kernel: tpu_custom_call.1
$region0: #{tpu_custom_call.1}
  #allocation0 [shape = 'u32[]', space=smem, size = 0x4, offset = 0x4, fixed_abs, tag = 'smem constant byte address 0x4 - core index']
  #allocation1 [shape = 'u32[144,128]{1,0:T(1,128)}', space=vmem, size = 0x12000, scoped, tag = 'internal scratch']
  %s0 = inlined_call_operand.vmem [shape: f32[8,160], index: 0, kind: input, shape index: {}]
  %s1 = inlined_call_operand.vmem [shape: f32[8,128], index: 1, kind: input, shape index: {}]
  %s2 = inlined_call_operand.vmem [shape: f32[8,256], index: 2, kind: input, shape index: {}]
  %s3 = inlined_call_operand.hbm [shape: f32[160,512], index: 3, kind: input, shape index: {}]
  %s4 = inlined_call_operand.vmem [shape: f32[1,512], index: 4, kind: input, shape index: {}]
  %s5 = inlined_call_operand.vmem [shape: f32[128,256], index: 5, kind: input, shape index: {}]
  %s6 = inlined_call_operand.vmem [shape: f32[1,256], index: 6, kind: input, shape index: {}]
  %s7 = inlined_call_operand.hbm [shape: f32[256,128], index: 7, kind: input, shape index: {}]
  %s8 = inlined_call_operand.vmem [shape: f32[384,10], index: 8, kind: input, shape index: {}]
  %s9 = inlined_call_operand.vmem [shape: f32[1,10], index: 9, kind: input, shape index: {}]
  %s10 = inlined_call_operand.hbm [shape: f32[8,256], index: 10, kind: output, shape index: {0}]
  %s11 = inlined_call_operand.hbm [shape: f32[8,10], index: 11, kind: output, shape index: {1}]
  %12 = xla_tuple %s10, %s11
  %s13 = sld [smem:[#allocation0]]
  $region66: #{tpu_custom_call.1} parent=0
    _
  %s15 = ssub.s32 1, %s13
  %s16 = scalar_select 0, %s15, %s13
  $region1: #{tpu_custom_call.1} parent=0
    #allocation2 [shape = 'u8[327680]{0}', space=vmem, size = 0x50000, scoped, tag = 'input window, operand 3, single buffered']
    #allocation3 [shape = 's32[1]{0}', space=sflag, size = 0x4, scoped, tag = 'scoped memory for tpu_custom_call.1']
    #allocation4 [shape = 's32[1]{0}', space=sflag, size = 0x4, scoped, tag = 'scoped memory for tpu_custom_call.1']
    #allocation5 [shape = 'u8[131072]{0}', space=vmem, size = 0x20000, scoped, tag = 'input window, operand 7, single buffered']
    #allocation6 [shape = 's32[1]{0}', space=sflag, size = 0x4, scoped, tag = 'scoped memory for tpu_custom_call.1']
    #allocation7 [shape = 'u8[8192]{0}', space=vmem, size = 0x2000, scoped, tag = 'output window, operand 0, single buffered']
    #allocation8 [shape = 'u8[4096]{0}', space=vmem, size = 0x1000, scoped, tag = 'output window, operand 1, single buffered']
    #allocation9 [shape = 's32[1]{0}', space=sflag, size = 0x4, scoped, tag = 'scoped memory for tpu_custom_call.1']
    %17 = vsyncpa [#allocation3], 0
    %18 = vsyncpa [#allocation6], 0
    %19 = vsyncpa [#allocation4], 0
    %20 = vsyncpa [#allocation9], 0
    // Predicated region
    $region2: #{tpu_custom_call.1} parent=1 // pred_check
      _
    $region3: #{tpu_custom_call.1} parent=1 // pred_check_branch
      %22 = sbr.rel (0) target = $region5
    $region4: #{tpu_custom_call.1} parent=1 // pred_region
      _
    $region5: #{tpu_custom_call.1} parent=1 // pred_fallthru
      _
    // Predicated region
    $region6: #{tpu_custom_call.1} parent=1 // pred_check
      _
    $region7: #{tpu_custom_call.1} parent=1 // pred_check_branch
      %24 = sbr.rel (0) target = $region9
    $region8: #{tpu_custom_call.1} parent=1 // pred_region
      _
    $region9: #{tpu_custom_call.1} parent=1 // pred_fallthru
      _
    // Predicated region
    $region10: #{tpu_custom_call.1} parent=1 // pred_check
      _
    $region11: #{tpu_custom_call.1} parent=1 // pred_check_branch
      %26 = sbr.rel (0) target = $region13
    $region12: #{tpu_custom_call.1} parent=1 // pred_region
      _
    $region13: #{tpu_custom_call.1} parent=1 // pred_fallthru
      _
    // Predicated region
    $region14: #{tpu_custom_call.1} parent=1 // pred_check
      _
    $region15: #{tpu_custom_call.1} parent=1 // pred_check_branch
      %28 = sbr.rel (0) target = $region17
    $region16: #{tpu_custom_call.1} parent=1 // pred_region
      %s30 = ssub.s32 10240, 10240
      %31 = vsyncadd [#allocation3], %s30
      %s32 = sshll.u32 [#allocation2], 4
      %s33 = int_to_ptr.vmem [resolvable:$true] %s32
      %38 = dma.hbm_to_vmem [thread:$0]  %s3, 10240, %s33, [#allocation3], 512, 512, 32
    $region17: #{tpu_custom_call.1} parent=1 // pred_fallthru
      _
    // Predicated region
    $region18: #{tpu_custom_call.1} parent=1 // pred_check
      _
    $region19: #{tpu_custom_call.1} parent=1 // pred_check_branch
      %40 = sbr.rel (0) target = $region21
    $region20: #{tpu_custom_call.1} parent=1 // pred_region
      _
    $region21: #{tpu_custom_call.1} parent=1 // pred_fallthru
      _
    // Predicated region
    $region22: #{tpu_custom_call.1} parent=1 // pred_check
      _
    $region23: #{tpu_custom_call.1} parent=1 // pred_check_branch
      %42 = sbr.rel (0) target = $region25
    $region24: #{tpu_custom_call.1} parent=1 // pred_region
      _
    $region25: #{tpu_custom_call.1} parent=1 // pred_fallthru
      _
    // Predicated region
    $region26: #{tpu_custom_call.1} parent=1 // pred_check
      _
    $region27: #{tpu_custom_call.1} parent=1 // pred_check_branch
      %44 = sbr.rel (0) target = $region29
    $region28: #{tpu_custom_call.1} parent=1 // pred_region
      _
    $region29: #{tpu_custom_call.1} parent=1 // pred_fallthru
      _
    // Predicated region
    $region30: #{tpu_custom_call.1} parent=1 // pred_check
      _
    $region31: #{tpu_custom_call.1} parent=1 // pred_check_branch
      %46 = sbr.rel (0) target = $region33
    $region32: #{tpu_custom_call.1} parent=1 // pred_region
      %s48 = ssub.s32 4096, 4096
      %49 = vsyncadd [#allocation6], %s48
      %s50 = sshll.u32 [#allocation5], 4
      %s51 = int_to_ptr.vmem [resolvable:$true] %s50
      %56 = dma.hbm_to_vmem [thread:$0]  %s7, 4096, %s51, [#allocation6], 128, 128, 8
    $region33: #{tpu_custom_call.1} parent=1 // pred_fallthru
      _
    // Predicated region
    $region34: #{tpu_custom_call.1} parent=1 // pred_check
      _
    $region35: #{tpu_custom_call.1} parent=1 // pred_check_branch
      %58 = sbr.rel (0) target = $region37
    $region36: #{tpu_custom_call.1} parent=1 // pred_region
      _
    $region37: #{tpu_custom_call.1} parent=1 // pred_fallthru
      _
    // Predicated region
    $region38: #{tpu_custom_call.1} parent=1 // pred_check
      _
    $region39: #{tpu_custom_call.1} parent=1 // pred_check_branch
      %60 = sbr.rel (0) target = $region41
    $region40: #{tpu_custom_call.1} parent=1 // pred_region
      _
    $region41: #{tpu_custom_call.1} parent=1 // pred_fallthru
      _
    // Predicated region
    $region42: #{tpu_custom_call.1} parent=1 // pred_check
      _
    $region43: #{tpu_custom_call.1} parent=1 // pred_check_branch
      %62 = sbr.rel (0) target = $region45
    $region44: #{tpu_custom_call.1} parent=1 // pred_region
      %63 = dma.done [#allocation3], 10240
    $region45: #{tpu_custom_call.1} parent=1 // pred_fallthru
      _
    // Predicated region
    $region46: #{tpu_custom_call.1} parent=1 // pred_check
      _
    $region47: #{tpu_custom_call.1} parent=1 // pred_check_branch
      %65 = sbr.rel (0) target = $region49
    $region48: #{tpu_custom_call.1} parent=1 // pred_region
      %66 = dma.done [#allocation6], 4096
    $region49: #{tpu_custom_call.1} parent=1 // pred_fallthru
      _
    %v67 = vld [vmem:[%s0] sm:$0xff]
    %v68 = vld [vmem:[%s0 + $0x8] sm:$0xff]
    %v69 = vld [vmem:[#allocation2] sm:$0xff]
    %v70 = vld [vmem:[#allocation2 + $0x8] sm:$0xff]
    %v71 = vld [vmem:[#allocation2 + $0x10] sm:$0xff]
    %v72 = vld [vmem:[#allocation2 + $0x18] sm:$0xff]
    %v73 = vld [vmem:[#allocation2 + $0x20] sm:$0xff]
    %v74 = vld [vmem:[#allocation2 + $0x28] sm:$0xff]
    %v75 = vld [vmem:[#allocation2 + $0x30] sm:$0xff]
    %v76 = vld [vmem:[#allocation2 + $0x38] sm:$0xff]
    %v77 = vld [vmem:[#allocation2 + $0x40] sm:$0xff]
    %v78 = vld [vmem:[#allocation2 + $0x48] sm:$0xff]
    %v79 = vld [vmem:[#allocation2 + $0x50] sm:$0xff]
    %v80 = vld [vmem:[#allocation2 + $0x58] sm:$0xff]
    %v81 = vld [vmem:[#allocation2 + $0x60] sm:$0xff]
    %v82 = vld [vmem:[#allocation2 + $0x68] sm:$0xff]
    %v83 = vld [vmem:[#allocation2 + $0x70] sm:$0xff]
    %v84 = vld [vmem:[#allocation2 + $0x78] sm:$0xff]
    %v85 = vld [vmem:[#allocation2 + $0x80] sm:$0xff]
    %v86 = vld [vmem:[#allocation2 + $0x88] sm:$0xff]
    %v87 = vld [vmem:[#allocation2 + $0x90] sm:$0xff]
    %v88 = vld [vmem:[#allocation2 + $0x98] sm:$0xff]
    %v89 = vld [vmem:[#allocation2 + $0xa0] sm:$0xff]
    %v90 = vld [vmem:[#allocation2 + $0xa8] sm:$0xff]
    %v91 = vld [vmem:[#allocation2 + $0xb0] sm:$0xff]
    %v92 = vld [vmem:[#allocation2 + $0xb8] sm:$0xff]
    %v93 = vld [vmem:[#allocation2 + $0xc0] sm:$0xff]
    %v94 = vld [vmem:[#allocation2 + $0xc8] sm:$0xff]
    %v95 = vld [vmem:[#allocation2 + $0xd0] sm:$0xff]
    %v96 = vld [vmem:[#allocation2 + $0xd8] sm:$0xff]
    %v97 = vld [vmem:[#allocation2 + $0xe0] sm:$0xff]
    %v98 = vld [vmem:[#allocation2 + $0xe8] sm:$0xff]
    %v99 = vld [vmem:[#allocation2 + $0xf0] sm:$0xff]
    %v100 = vld [vmem:[#allocation2 + $0xf8] sm:$0xff]
    %v101 = vld [vmem:[#allocation2 + $0x100] sm:$0xff]
    %v102 = vld [vmem:[#allocation2 + $0x108] sm:$0xff]
    %v103 = vld [vmem:[#allocation2 + $0x110] sm:$0xff]
    %v104 = vld [vmem:[#allocation2 + $0x118] sm:$0xff]
    %v105 = vld [vmem:[#allocation2 + $0x120] sm:$0xff]
    %v106 = vld [vmem:[#allocation2 + $0x128] sm:$0xff]
    %v107 = vld [vmem:[#allocation2 + $0x130] sm:$0xff]
    %v108 = vld [vmem:[#allocation2 + $0x138] sm:$0xff]
    %v109 = vld [vmem:[#allocation2 + $0x140] sm:$0xff]
    %v110 = vld [vmem:[#allocation2 + $0x148] sm:$0xff]
    %v111 = vld [vmem:[#allocation2 + $0x150] sm:$0xff]
    %v112 = vld [vmem:[#allocation2 + $0x158] sm:$0xff]
    %v113 = vld [vmem:[#allocation2 + $0x160] sm:$0xff]
    %v114 = vld [vmem:[#allocation2 + $0x168] sm:$0xff]
    %v115 = vld [vmem:[#allocation2 + $0x170] sm:$0xff]
    %v116 = vld [vmem:[#allocation2 + $0x178] sm:$0xff]
    %v117 = vld [vmem:[#allocation2 + $0x180] sm:$0xff]
    %v118 = vld [vmem:[#allocation2 + $0x188] sm:$0xff]
    %v119 = vld [vmem:[#allocation2 + $0x190] sm:$0xff]
    %v120 = vld [vmem:[#allocation2 + $0x198] sm:$0xff]
    %v121 = vld [vmem:[#allocation2 + $0x1a0] sm:$0xff]
    %v122 = vld [vmem:[#allocation2 + $0x1a8] sm:$0xff]
    %v123 = vld [vmem:[#allocation2 + $0x1b0] sm:$0xff]
    %v124 = vld [vmem:[#allocation2 + $0x1b8] sm:$0xff]
    %v125 = vld [vmem:[#allocation2 + $0x1c0] sm:$0xff]
    %v126 = vld [vmem:[#allocation2 + $0x1c8] sm:$0xff]
    %v127 = vld [vmem:[#allocation2 + $0x1d0] sm:$0xff]
    %v128 = vld [vmem:[#allocation2 + $0x1d8] sm:$0xff]
    %v129 = vld [vmem:[#allocation2 + $0x1e0] sm:$0xff]
    %v130 = vld [vmem:[#allocation2 + $0x1e8] sm:$0xff]
    %v131 = vld [vmem:[#allocation2 + $0x1f0] sm:$0xff]
    %v132 = vld [vmem:[#allocation2 + $0x1f8] sm:$0xff]
    %v133 = vld [vmem:[#allocation2 + $0x200] sm:$0xff]
    %v134 = vld [vmem:[#allocation2 + $0x208] sm:$0xff]
    %v135 = vld [vmem:[#allocation2 + $0x210] sm:$0xff]
    %v136 = vld [vmem:[#allocation2 + $0x218] sm:$0xff]
    %v137 = vld [vmem:[#allocation2 + $0x220] sm:$0xff]
    %v138 = vld [vmem:[#allocation2 + $0x228] sm:$0xff]
    %v139 = vld [vmem:[#allocation2 + $0x230] sm:$0xff]
    %v140 = vld [vmem:[#allocation2 + $0x238] sm:$0xff]
    %v141 = vld [vmem:[#allocation2 + $0x240] sm:$0xff]
    %v142 = vld [vmem:[#allocation2 + $0x248] sm:$0xff]
    %v143 = vld [vmem:[#allocation2 + $0x250] sm:$0xff]
    %v144 = vld [vmem:[#allocation2 + $0x258] sm:$0xff]
    %v145 = vld [vmem:[#allocation2 + $0x260] sm:$0xff]
    %v146 = vld [vmem:[#allocation2 + $0x268] sm:$0xff]
    %v147 = vld [vmem:[#allocation2 + $0x270] sm:$0xff]
    %v148 = vld [vmem:[#allocation2 + $0x278] sm:$0xff]
    %v149 = vld [vmem:[%s4] sm:$0xf]
    %v151 = vlaneseq
    %v152 = vshrl.u32 %v151, 7
    %v153 = vsub.s32 0, %v152
    %v154 = vrot.slane %v149, %v153
    %v155 = vlaneseq
    %v156 = vshrl.u32 %v155, 7
    %v157 = vsub.s32 1, %v156
    %v158 = vrot.slane %v149, %v157
    %v159 = vlaneseq
    %v160 = vshrl.u32 %v159, 7
    %v161 = vsub.s32 2, %v160
    %v162 = vrot.slane %v149, %v161
    %v163 = vlaneseq
    %v164 = vshrl.u32 %v163, 7
    %v165 = vsub.s32 3, %v164
    %v166 = vrot.slane %v149, %v165
    %vm171 = vcmask 261120
    %v173 = vsel %vm171, %v68, 0
    %175 = vmatprep.subr.mxu0 %v70
    %176 = vmatpush1.msra.mxu0 %v69
    %177 = vmatprep.subr.mxu0 %v74
    %178 = vmatpush1.msra.mxu0 %v73
    %179 = vmatprep.subr.mxu0 %v78
    %180 = vmatpush1.msra.mxu0 %v77
    %181 = vmatprep.subr.mxu0 %v82
    %182 = vmatpush1.msra.mxu0 %v81
    %183 = vmatprep.subr.mxu0 %v86
    %184 = vmatpush1.msra.mxu0 %v85
    %185 = vmatprep.subr.mxu0 %v90
    %186 = vmatpush1.msra.mxu0 %v89
    %187 = vmatprep.subr.mxu0 %v94
    %188 = vmatpush1.msra.mxu0 %v93
    %189 = vmatprep.subr.mxu0 %v98
    %190 = vmatpush1.msra.mxu0 %v97
    %191 = vmatprep.subr.mxu0 %v102
    %192 = vmatpush1.msra.mxu0 %v101
    %193 = vmatprep.subr.mxu0 %v106
    %194 = vmatpush1.msra.mxu0 %v105
    %195 = vmatprep.subr.mxu0 %v110
    %196 = vmatpush1.msra.mxu0 %v109
    %197 = vmatprep.subr.mxu0 %v114
    %198 = vmatpush1.msra.mxu0 %v113
    %199 = vmatprep.subr.mxu0 %v118
    %200 = vmatpush1.msra.mxu0 %v117
    %201 = vmatprep.subr.mxu0 %v122
    %202 = vmatpush1.msra.mxu0 %v121
    %203 = vmatprep.subr.mxu0 %v126
    %204 = vmatpush1.msra.mxu0 %v125
    %205 = vmatprep.subr.mxu0 %v130
    %206 = vmatpush1.msra.mxu0 %v129
    %207 = vmatprep.subr.mxu0 %v134
    %208 = vmatpush1.msra.mxu0 %v133
    %209 = vmatprep.subr.mxu0 %v138
    %210 = vmatpush1.msra.mxu0 %v137
    %211 = vmatprep.subr.mxu0 %v142
    %212 = vmatpush1.msra.mxu0 %v141
    %213 = vmatprep.subr.mxu0 %v146
    %214 = vmatpush1.msra.mxu0 %v145
    %215 = vmatprep.subr.mxu0 0.0
    %216 = vmatpush1.msra.mxu0 0.0
    %217 = vmatprep.subr.mxu0 0.0
    %218 = vmatpush1.msra.mxu0 0.0
    %219 = vmatprep.subr.mxu0 0.0
    %220 = vmatpush1.msra.mxu0 0.0
    %221 = vmatprep.subr.mxu0 0.0
    %222 = vmatpush1.msra.mxu0 0.0
    %223 = vmatprep.subr.mxu0 0.0
    %224 = vmatpush1.msra.mxu0 0.0
    %225 = vmatprep.subr.mxu0 0.0
    %226 = vmatpush1.msra.mxu0 0.0
    %227 = vmatprep.subr.mxu0 0.0
    %228 = vmatpush1.msra.mxu0 0.0
    %229 = vmatprep.subr.mxu0 0.0
    %230 = vmatpush1.msra.mxu0 0.0
    %231 = vmatprep.subr.mxu0 0.0
    %232 = vmatpush1.msra.mxu0 0.0
    %233 = vmatprep.subr.mxu0 0.0
    %234 = vmatpush1.msra.mxu0 0.0
    %235 = vmatprep.subr.mxu0 0.0
    %236 = vmatpush1.msra.mxu0 0.0
    %237 = vmatprep.subr.mxu0 0.0
    %238 = vmatpush1.msra.mxu0 0.0
    %239 = vmatprep.mubr.f32.mxu0 %v173
    %240 = vmatmul.mubr.f32.gmra.mrb[0].mxu0 %v67
    %v241 = vpop.f32.mrb[0].mxu0
    %v242 = vadd.f32 %v154, %v241
    %v243 = vpop.f32.mrb[0].mxu0
    %v244 = vadd.f32 %v158, %v243
    %245 = vdwg.mxu0
    %246 = vmatprep.subr.mxu0 %v72
    %247 = vmatpush1.msra.mxu0 %v71
    %248 = vmatprep.subr.mxu0 %v76
    %249 = vmatpush1.msra.mxu0 %v75
    %250 = vmatprep.subr.mxu0 %v80
    %251 = vmatpush1.msra.mxu0 %v79
    %252 = vmatprep.subr.mxu0 %v84
    %253 = vmatpush1.msra.mxu0 %v83
    %254 = vmatprep.subr.mxu0 %v88
    %255 = vmatpush1.msra.mxu0 %v87
    %256 = vmatprep.subr.mxu0 %v92
    %257 = vmatpush1.msra.mxu0 %v91
    %258 = vmatprep.subr.mxu0 %v96
    %259 = vmatpush1.msra.mxu0 %v95
    %260 = vmatprep.subr.mxu0 %v100
    %261 = vmatpush1.msra.mxu0 %v99
    %262 = vmatprep.subr.mxu0 %v104
    %263 = vmatpush1.msra.mxu0 %v103
    %264 = vmatprep.subr.mxu0 %v108
    %265 = vmatpush1.msra.mxu0 %v107
    %266 = vmatprep.subr.mxu0 %v112
    %267 = vmatpush1.msra.mxu0 %v111
    %268 = vmatprep.subr.mxu0 %v116
    %269 = vmatpush1.msra.mxu0 %v115
    %270 = vmatprep.subr.mxu0 %v120
    %271 = vmatpush1.msra.mxu0 %v119
    %272 = vmatprep.subr.mxu0 %v124
    %273 = vmatpush1.msra.mxu0 %v123
    %274 = vmatprep.subr.mxu0 %v128
    %275 = vmatpush1.msra.mxu0 %v127
    %276 = vmatprep.subr.mxu0 %v132
    %277 = vmatpush1.msra.mxu0 %v131
    %278 = vmatprep.subr.mxu0 %v136
    %279 = vmatpush1.msra.mxu0 %v135
    %280 = vmatprep.subr.mxu0 %v140
    %281 = vmatpush1.msra.mxu0 %v139
    %282 = vmatprep.subr.mxu0 %v144
    %283 = vmatpush1.msra.mxu0 %v143
    %284 = vmatprep.subr.mxu0 %v148
    %285 = vmatpush1.msra.mxu0 %v147
    %286 = vmatprep.subr.mxu0 0.0
    %287 = vmatpush1.msra.mxu0 0.0
    %288 = vmatprep.subr.mxu0 0.0
    %289 = vmatpush1.msra.mxu0 0.0
    %290 = vmatprep.subr.mxu0 0.0
    %291 = vmatpush1.msra.mxu0 0.0
    %292 = vmatprep.subr.mxu0 0.0
    %293 = vmatpush1.msra.mxu0 0.0
    %294 = vmatprep.subr.mxu0 0.0
    %295 = vmatpush1.msra.mxu0 0.0
    %296 = vmatprep.subr.mxu0 0.0
    %297 = vmatpush1.msra.mxu0 0.0
    %298 = vmatprep.subr.mxu0 0.0
    %299 = vmatpush1.msra.mxu0 0.0
    %300 = vmatprep.subr.mxu0 0.0
    %301 = vmatpush1.msra.mxu0 0.0
    %302 = vmatprep.subr.mxu0 0.0
    %303 = vmatpush1.msra.mxu0 0.0
    %304 = vmatprep.subr.mxu0 0.0
    %305 = vmatpush1.msra.mxu0 0.0
    %306 = vmatprep.subr.mxu0 0.0
    %307 = vmatpush1.msra.mxu0 0.0
    %308 = vmatprep.subr.mxu0 0.0
    %309 = vmatpush1.msra.mxu0 0.0
    %310 = vmatprep.mubr.f32.mxu0 %v173
    %311 = vmatmul.mubr.f32.gmra.mrb[0].mxu0 %v67
    %v312 = vpop.f32.mrb[0].mxu0
    %v313 = vadd.f32 %v162, %v312
    %v314 = vpop.f32.mrb[0].mxu0
    %v315 = vadd.f32 %v166, %v314
    %316 = vdwg.mxu0
    %v317 = vxor.u32 %v242, 2147483648
    %v318 = vmul.f32 %v317, 1.442695
    %v319 = vpow.pop %v318
    %v320 = vadd.f32 %v319, 1.0
    %v321 = vrcp.pop %v320
    %v322 = vmul.f32 1.0, %v321
    %v323 = vxor.u32 %v244, 2147483648
    %v324 = vmul.f32 %v323, 1.442695
    %v325 = vpow.pop %v324
    %v326 = vadd.f32 %v325, 1.0
    %v327 = vrcp.pop %v326
    %v328 = vmul.f32 1.0, %v327
    %v329 = vtanh.pop %v313
    %v330 = vxor.u32 %v315, 2147483648
    %v331 = vmul.f32 %v330, 1.442695
    %v332 = vpow.pop %v331
    %v333 = vadd.f32 %v332, 1.0
    %v334 = vrcp.pop %v333
    %v335 = vmul.f32 1.0, %v334
    %v336 = vld [vmem:[%s1] sm:$0xff]
    %v337 = vmul.f32 %v328, %v336
    %v338 = vmul.f32 %v322, %v329
    %v339 = vadd.f32 %v337, %v338
    %v340 = vtanh.pop %v339
    %v341 = vmul.f32 %v335, %v340
    %342 = vst [vmem:[#allocation7] sm:$0xff] %v341
    %343 = vst [vmem:[#allocation7 + $0x8] sm:$0xff] %v339
    %v344 = vld [vmem:[%s5] sm:$0xff]
    %v345 = vld [vmem:[%s5 + $0x8] sm:$0xff]
    %v346 = vld [vmem:[%s5 + $0x10] sm:$0xff]
    %v347 = vld [vmem:[%s5 + $0x18] sm:$0xff]
    %v348 = vld [vmem:[%s5 + $0x20] sm:$0xff]
    %v349 = vld [vmem:[%s5 + $0x28] sm:$0xff]
    %v350 = vld [vmem:[%s5 + $0x30] sm:$0xff]
    %v351 = vld [vmem:[%s5 + $0x38] sm:$0xff]
    %v352 = vld [vmem:[%s5 + $0x40] sm:$0xff]
    %v353 = vld [vmem:[%s5 + $0x48] sm:$0xff]
    %v354 = vld [vmem:[%s5 + $0x50] sm:$0xff]
    %v355 = vld [vmem:[%s5 + $0x58] sm:$0xff]
    %v356 = vld [vmem:[%s5 + $0x60] sm:$0xff]
    %v357 = vld [vmem:[%s5 + $0x68] sm:$0xff]
    %v358 = vld [vmem:[%s5 + $0x70] sm:$0xff]
    %v359 = vld [vmem:[%s5 + $0x78] sm:$0xff]
    %v360 = vld [vmem:[%s5 + $0x80] sm:$0xff]
    %v361 = vld [vmem:[%s5 + $0x88] sm:$0xff]
    %v362 = vld [vmem:[%s5 + $0x90] sm:$0xff]
    %v363 = vld [vmem:[%s5 + $0x98] sm:$0xff]
    %v364 = vld [vmem:[%s5 + $0xa0] sm:$0xff]
    %v365 = vld [vmem:[%s5 + $0xa8] sm:$0xff]
    %v366 = vld [vmem:[%s5 + $0xb0] sm:$0xff]
    %v367 = vld [vmem:[%s5 + $0xb8] sm:$0xff]
    %v368 = vld [vmem:[%s5 + $0xc0] sm:$0xff]
    %v369 = vld [vmem:[%s5 + $0xc8] sm:$0xff]
    %v370 = vld [vmem:[%s5 + $0xd0] sm:$0xff]
    %v371 = vld [vmem:[%s5 + $0xd8] sm:$0xff]
    %v372 = vld [vmem:[%s5 + $0xe0] sm:$0xff]
    %v373 = vld [vmem:[%s5 + $0xe8] sm:$0xff]
    %v374 = vld [vmem:[%s5 + $0xf0] sm:$0xff]
    %v375 = vld [vmem:[%s5 + $0xf8] sm:$0xff]
    %v376 = vld [vmem:[%s6] sm:$0x3]
    %v378 = vlaneseq
    %v379 = vshrl.u32 %v378, 7
    %v380 = vsub.s32 0, %v379
    %v381 = vrot.slane %v376, %v380
    %v382 = vlaneseq
    %v383 = vshrl.u32 %v382, 7
    %v384 = vsub.s32 1, %v383
    %v385 = vrot.slane %v376, %v384
    %388 = vmatprep.subr.mxu0 %v345
    %389 = vmatpush1.msra.mxu0 %v344
    %390 = vmatprep.subr.mxu0 %v347
    %391 = vmatpush1.msra.mxu0 %v346
    %392 = vmatprep.subr.mxu0 %v349
    %393 = vmatpush1.msra.mxu0 %v348
    %394 = vmatprep.subr.mxu0 %v351
    %395 = vmatpush1.msra.mxu0 %v350
    %396 = vmatprep.subr.mxu0 %v353
    %397 = vmatpush1.msra.mxu0 %v352
    %398 = vmatprep.subr.mxu0 %v355
    %399 = vmatpush1.msra.mxu0 %v354
    %400 = vmatprep.subr.mxu0 %v357
    %401 = vmatpush1.msra.mxu0 %v356
    %402 = vmatprep.subr.mxu0 %v359
    %403 = vmatpush1.msra.mxu0 %v358
    %404 = vmatprep.subr.mxu0 %v361
    %405 = vmatpush1.msra.mxu0 %v360
    %406 = vmatprep.subr.mxu0 %v363
    %407 = vmatpush1.msra.mxu0 %v362
    %408 = vmatprep.subr.mxu0 %v365
    %409 = vmatpush1.msra.mxu0 %v364
    %410 = vmatprep.subr.mxu0 %v367
    %411 = vmatpush1.msra.mxu0 %v366
    %412 = vmatprep.subr.mxu0 %v369
    %413 = vmatpush1.msra.mxu0 %v368
    %414 = vmatprep.subr.mxu0 %v371
    %415 = vmatpush1.msra.mxu0 %v370
    %416 = vmatprep.subr.mxu0 %v373
    %417 = vmatpush1.msra.mxu0 %v372
    %418 = vmatprep.subr.mxu0 %v375
    %419 = vmatpush1.msra.mxu0 %v374
    %420 = vmatprep.subr.mxu0 0.0
    %421 = vmatpush1.msra.mxu0 0.0
    %422 = vmatprep.subr.mxu0 0.0
    %423 = vmatpush1.msra.mxu0 0.0
    %424 = vmatprep.subr.mxu0 0.0
    %425 = vmatpush1.msra.mxu0 0.0
    %426 = vmatprep.subr.mxu0 0.0
    %427 = vmatpush1.msra.mxu0 0.0
    %428 = vmatprep.subr.mxu0 0.0
    %429 = vmatpush1.msra.mxu0 0.0
    %430 = vmatprep.subr.mxu0 0.0
    %431 = vmatpush1.msra.mxu0 0.0
    %432 = vmatprep.subr.mxu0 0.0
    %433 = vmatpush1.msra.mxu0 0.0
    %434 = vmatprep.subr.mxu0 0.0
    %435 = vmatpush1.msra.mxu0 0.0
    %436 = vmatprep.subr.mxu0 0.0
    %437 = vmatpush1.msra.mxu0 0.0
    %438 = vmatprep.subr.mxu0 0.0
    %439 = vmatpush1.msra.mxu0 0.0
    %440 = vmatprep.subr.mxu0 0.0
    %441 = vmatpush1.msra.mxu0 0.0
    %442 = vmatprep.subr.mxu0 0.0
    %443 = vmatpush1.msra.mxu0 0.0
    %444 = vmatprep.subr.mxu0 0.0
    %445 = vmatpush1.msra.mxu0 0.0
    %446 = vmatprep.subr.mxu0 0.0
    %447 = vmatpush1.msra.mxu0 0.0
    %448 = vmatprep.subr.mxu0 0.0
    %449 = vmatpush1.msra.mxu0 0.0
    %450 = vmatprep.subr.mxu0 0.0
    %451 = vmatpush1.msra.mxu0 0.0
    %452 = vmatprep.mubr.f32.mxu0 0.0
    %453 = vmatmul.mubr.f32.gmra.mrb[0].mxu0 %v341
    %v454 = vpop.f32.mrb[0].mxu0
    %v455 = vadd.f32 %v381, %v454
    %v456 = vpop.f32.mrb[0].mxu0
    %v457 = vadd.f32 %v385, %v456
    %458 = vdwg.mxu0
    %v459 = vmax.f32 %v455, 0.0
    %v460 = vmax.f32 %v457, 0.0
    %v461 = vld [vmem:[%s2] sm:$0xff]
    %v462 = vld [vmem:[%s2 + $0x8] sm:$0xff]
    %v463 = vld [vmem:[#allocation5] sm:$0xff]
    %v464 = vld [vmem:[#allocation5 + $0x8] sm:$0xff]
    %v465 = vld [vmem:[#allocation5 + $0x10] sm:$0xff]
    %v466 = vld [vmem:[#allocation5 + $0x18] sm:$0xff]
    %v467 = vld [vmem:[#allocation5 + $0x20] sm:$0xff]
    %v468 = vld [vmem:[#allocation5 + $0x28] sm:$0xff]
    %v469 = vld [vmem:[#allocation5 + $0x30] sm:$0xff]
    %v470 = vld [vmem:[#allocation5 + $0x38] sm:$0xff]
    %v471 = vld [vmem:[#allocation5 + $0x40] sm:$0xff]
    %v472 = vld [vmem:[#allocation5 + $0x48] sm:$0xff]
    %v473 = vld [vmem:[#allocation5 + $0x50] sm:$0xff]
    %v474 = vld [vmem:[#allocation5 + $0x58] sm:$0xff]
    %v475 = vld [vmem:[#allocation5 + $0x60] sm:$0xff]
    %v476 = vld [vmem:[#allocation5 + $0x68] sm:$0xff]
    %v477 = vld [vmem:[#allocation5 + $0x70] sm:$0xff]
    %v478 = vld [vmem:[#allocation5 + $0x78] sm:$0xff]
    %v479 = vld [vmem:[#allocation5 + $0x80] sm:$0xff]
    %v480 = vld [vmem:[#allocation5 + $0x88] sm:$0xff]
    %v481 = vld [vmem:[#allocation5 + $0x90] sm:$0xff]
    %v482 = vld [vmem:[#allocation5 + $0x98] sm:$0xff]
    %v483 = vld [vmem:[#allocation5 + $0xa0] sm:$0xff]
    %v484 = vld [vmem:[#allocation5 + $0xa8] sm:$0xff]
    %v485 = vld [vmem:[#allocation5 + $0xb0] sm:$0xff]
    %v486 = vld [vmem:[#allocation5 + $0xb8] sm:$0xff]
    %v487 = vld [vmem:[#allocation5 + $0xc0] sm:$0xff]
    %v488 = vld [vmem:[#allocation5 + $0xc8] sm:$0xff]
    %v489 = vld [vmem:[#allocation5 + $0xd0] sm:$0xff]
    %v490 = vld [vmem:[#allocation5 + $0xd8] sm:$0xff]
    %v491 = vld [vmem:[#allocation5 + $0xe0] sm:$0xff]
    %v492 = vld [vmem:[#allocation5 + $0xe8] sm:$0xff]
    %v493 = vld [vmem:[#allocation5 + $0xf0] sm:$0xff]
    %v494 = vld [vmem:[#allocation5 + $0xf8] sm:$0xff]
    %495 = vmatprep.subr.mxu0 0.0
    %496 = vmatpush1.msra.mxu0 %v463
    %497 = vmatprep.subr.mxu0 0.0
    %498 = vmatpush1.msra.mxu0 %v464
    %499 = vmatprep.subr.mxu0 0.0
    %500 = vmatpush1.msra.mxu0 %v465
    %501 = vmatprep.subr.mxu0 0.0
    %502 = vmatpush1.msra.mxu0 %v466
    %503 = vmatprep.subr.mxu0 0.0
    %504 = vmatpush1.msra.mxu0 %v467
    %505 = vmatprep.subr.mxu0 0.0
    %506 = vmatpush1.msra.mxu0 %v468
    %507 = vmatprep.subr.mxu0 0.0
    %508 = vmatpush1.msra.mxu0 %v469
    %509 = vmatprep.subr.mxu0 0.0
    %510 = vmatpush1.msra.mxu0 %v470
    %511 = vmatprep.subr.mxu0 0.0
    %512 = vmatpush1.msra.mxu0 %v471
    %513 = vmatprep.subr.mxu0 0.0
    %514 = vmatpush1.msra.mxu0 %v472
    %515 = vmatprep.subr.mxu0 0.0
    %516 = vmatpush1.msra.mxu0 %v473
    %517 = vmatprep.subr.mxu0 0.0
    %518 = vmatpush1.msra.mxu0 %v474
    %519 = vmatprep.subr.mxu0 0.0
    %520 = vmatpush1.msra.mxu0 %v475
    %521 = vmatprep.subr.mxu0 0.0
    %522 = vmatpush1.msra.mxu0 %v476
    %523 = vmatprep.subr.mxu0 0.0
    %524 = vmatpush1.msra.mxu0 %v477
    %525 = vmatprep.subr.mxu0 0.0
    %526 = vmatpush1.msra.mxu0 %v478
    %527 = vmatprep.subr.mxu0 0.0
    %528 = vmatpush1.msra.mxu0 %v479
    %529 = vmatprep.subr.mxu0 0.0
    %530 = vmatpush1.msra.mxu0 %v480
    %531 = vmatprep.subr.mxu0 0.0
    %532 = vmatpush1.msra.mxu0 %v481
    %533 = vmatprep.subr.mxu0 0.0
    %534 = vmatpush1.msra.mxu0 %v482
    %535 = vmatprep.subr.mxu0 0.0
    %536 = vmatpush1.msra.mxu0 %v483
    %537 = vmatprep.subr.mxu0 0.0
    %538 = vmatpush1.msra.mxu0 %v484
    %539 = vmatprep.subr.mxu0 0.0
    %540 = vmatpush1.msra.mxu0 %v485
    %541 = vmatprep.subr.mxu0 0.0
    %542 = vmatpush1.msra.mxu0 %v486
    %543 = vmatprep.subr.mxu0 0.0
    %544 = vmatpush1.msra.mxu0 %v487
    %545 = vmatprep.subr.mxu0 0.0
    %546 = vmatpush1.msra.mxu0 %v488
    %547 = vmatprep.subr.mxu0 0.0
    %548 = vmatpush1.msra.mxu0 %v489
    %549 = vmatprep.subr.mxu0 0.0
    %550 = vmatpush1.msra.mxu0 %v490
    %551 = vmatprep.subr.mxu0 0.0
    %552 = vmatpush1.msra.mxu0 %v491
    %553 = vmatprep.subr.mxu0 0.0
    %554 = vmatpush1.msra.mxu0 %v492
    %555 = vmatprep.subr.mxu0 0.0
    %556 = vmatpush1.msra.mxu0 %v493
    %557 = vmatprep.subr.mxu0 0.0
    %558 = vmatpush1.msra.mxu0 %v494
    %559 = vmatprep.mubr.f32.mxu0 %v462
    %560 = vmatmul.mubr.f32.gmra.mrb[0].mxu0 %v461
    %v561 = vpop.f32.mrb[0].mxu0
    %v562 = vadd.f32 0.0, %v561
    %v563 = vpop.f32.mrb[0].mxu0
    %564 = vdwg.mxu0
    %v565 = vmul.f32 %v341, %v562
    %v566 = vld [vmem:[%s8] sm:$0xff]
    %v567 = vld [vmem:[%s8 + $0x8] sm:$0xff]
    %v568 = vld [vmem:[%s8 + $0x10] sm:$0xff]
    %v569 = vld [vmem:[%s8 + $0x18] sm:$0xff]
    %v570 = vld [vmem:[%s8 + $0x20] sm:$0xff]
    %v571 = vld [vmem:[%s8 + $0x28] sm:$0xff]
    %v572 = vld [vmem:[%s8 + $0x30] sm:$0xff]
    %v573 = vld [vmem:[%s8 + $0x38] sm:$0xff]
    %v574 = vld [vmem:[%s8 + $0x40] sm:$0xff]
    %v575 = vld [vmem:[%s8 + $0x48] sm:$0xff]
    %v576 = vld [vmem:[%s8 + $0x50] sm:$0xff]
    %v577 = vld [vmem:[%s8 + $0x58] sm:$0xff]
    %v578 = vld [vmem:[%s8 + $0x60] sm:$0xff]
    %v579 = vld [vmem:[%s8 + $0x68] sm:$0xff]
    %v580 = vld [vmem:[%s8 + $0x70] sm:$0xff]
    %v581 = vld [vmem:[%s8 + $0x78] sm:$0xff]
    %v582 = vld [vmem:[%s8 + $0x80] sm:$0xff]
    %v583 = vld [vmem:[%s8 + $0x88] sm:$0xff]
    %v584 = vld [vmem:[%s8 + $0x90] sm:$0xff]
    %v585 = vld [vmem:[%s8 + $0x98] sm:$0xff]
    %v586 = vld [vmem:[%s8 + $0xa0] sm:$0xff]
    %v587 = vld [vmem:[%s8 + $0xa8] sm:$0xff]
    %v588 = vld [vmem:[%s8 + $0xb0] sm:$0xff]
    %v589 = vld [vmem:[%s8 + $0xb8] sm:$0xff]
    %v590 = vld [vmem:[%s8 + $0xc0] sm:$0xff]
    %v591 = vld [vmem:[%s8 + $0xc8] sm:$0xff]
    %v592 = vld [vmem:[%s8 + $0xd0] sm:$0xff]
    %v593 = vld [vmem:[%s8 + $0xd8] sm:$0xff]
    %v594 = vld [vmem:[%s8 + $0xe0] sm:$0xff]
    %v595 = vld [vmem:[%s8 + $0xe8] sm:$0xff]
    %v596 = vld [vmem:[%s8 + $0xf0] sm:$0xff]
    %v597 = vld [vmem:[%s8 + $0xf8] sm:$0xff]
    %v598 = vld [vmem:[%s8 + $0x100] sm:$0xff]
    %v599 = vld [vmem:[%s8 + $0x108] sm:$0xff]
    %v600 = vld [vmem:[%s8 + $0x110] sm:$0xff]
    %v601 = vld [vmem:[%s8 + $0x118] sm:$0xff]
    %v602 = vld [vmem:[%s8 + $0x120] sm:$0xff]
    %v603 = vld [vmem:[%s8 + $0x128] sm:$0xff]
    %v604 = vld [vmem:[%s8 + $0x130] sm:$0xff]
    %v605 = vld [vmem:[%s8 + $0x138] sm:$0xff]
    %v606 = vld [vmem:[%s8 + $0x140] sm:$0xff]
    %v607 = vld [vmem:[%s8 + $0x148] sm:$0xff]
    %v608 = vld [vmem:[%s8 + $0x150] sm:$0xff]
    %v609 = vld [vmem:[%s8 + $0x158] sm:$0xff]
    %v610 = vld [vmem:[%s8 + $0x160] sm:$0xff]
    %v611 = vld [vmem:[%s8 + $0x168] sm:$0xff]
    %v612 = vld [vmem:[%s8 + $0x170] sm:$0xff]
    %v613 = vld [vmem:[%s8 + $0x178] sm:$0xff]
    %v614 = vld [vmem:[%s9] sm:$0x1]
    %v616 = vlaneseq
    %v617 = vshrl.u32 %v616, 7
    %v618 = vsub.s32 0, %v617
    %v619 = vrot.slane %v614, %v618
    %621 = vmatprep.subr.mxu0 0.0
    %622 = vmatpush1.msra.mxu0 %v566
    %623 = vmatprep.subr.mxu0 0.0
    %624 = vmatpush1.msra.mxu0 %v567
    %625 = vmatprep.subr.mxu0 0.0
    %626 = vmatpush1.msra.mxu0 %v568
    %627 = vmatprep.subr.mxu0 0.0
    %628 = vmatpush1.msra.mxu0 %v569
    %629 = vmatprep.subr.mxu0 0.0
    %630 = vmatpush1.msra.mxu0 %v570
    %631 = vmatprep.subr.mxu0 0.0
    %632 = vmatpush1.msra.mxu0 %v571
    %633 = vmatprep.subr.mxu0 0.0
    %634 = vmatpush1.msra.mxu0 %v572
    %635 = vmatprep.subr.mxu0 0.0
    %636 = vmatpush1.msra.mxu0 %v573
    %637 = vmatprep.subr.mxu0 0.0
    %638 = vmatpush1.msra.mxu0 %v574
    %639 = vmatprep.subr.mxu0 0.0
    %640 = vmatpush1.msra.mxu0 %v575
    %641 = vmatprep.subr.mxu0 0.0
    %642 = vmatpush1.msra.mxu0 %v576
    %643 = vmatprep.subr.mxu0 0.0
    %644 = vmatpush1.msra.mxu0 %v577
    %645 = vmatprep.subr.mxu0 0.0
    %646 = vmatpush1.msra.mxu0 %v578
    %647 = vmatprep.subr.mxu0 0.0
    %648 = vmatpush1.msra.mxu0 %v579
    %649 = vmatprep.subr.mxu0 0.0
    %650 = vmatpush1.msra.mxu0 %v580
    %651 = vmatprep.subr.mxu0 0.0
    %652 = vmatpush1.msra.mxu0 %v581
    %653 = vmatprep.subr.mxu0 0.0
    %654 = vmatpush1.msra.mxu0 %v582
    %655 = vmatprep.subr.mxu0 0.0
    %656 = vmatpush1.msra.mxu0 %v583
    %657 = vmatprep.subr.mxu0 0.0
    %658 = vmatpush1.msra.mxu0 %v584
    %659 = vmatprep.subr.mxu0 0.0
    %660 = vmatpush1.msra.mxu0 %v585
    %661 = vmatprep.subr.mxu0 0.0
    %662 = vmatpush1.msra.mxu0 %v586
    %663 = vmatprep.subr.mxu0 0.0
    %664 = vmatpush1.msra.mxu0 %v587
    %665 = vmatprep.subr.mxu0 0.0
    %666 = vmatpush1.msra.mxu0 %v588
    %667 = vmatprep.subr.mxu0 0.0
    %668 = vmatpush1.msra.mxu0 %v589
    %669 = vmatprep.subr.mxu0 0.0
    %670 = vmatpush1.msra.mxu0 %v590
    %671 = vmatprep.subr.mxu0 0.0
    %672 = vmatpush1.msra.mxu0 %v591
    %673 = vmatprep.subr.mxu0 0.0
    %674 = vmatpush1.msra.mxu0 %v592
    %675 = vmatprep.subr.mxu0 0.0
    %676 = vmatpush1.msra.mxu0 %v593
    %677 = vmatprep.subr.mxu0 0.0
    %678 = vmatpush1.msra.mxu0 %v594
    %679 = vmatprep.subr.mxu0 0.0
    %680 = vmatpush1.msra.mxu0 %v595
    %681 = vmatprep.subr.mxu0 0.0
    %682 = vmatpush1.msra.mxu0 %v596
    %683 = vmatprep.subr.mxu0 0.0
    %684 = vmatpush1.msra.mxu0 %v597
    %685 = vmatprep.mubr.f32.mxu0 %v459
    %686 = vmatmul.mubr.f32.gmra.mrb[0].mxu0 %v565
    %v687 = vpop.f32.mrb[0].mxu0
    %v688 = vadd.f32 %v619, %v687
    %v689 = vpop.f32.mrb[0].mxu0
    %690 = vdwg.mxu0
    %691 = vmatprep.subr.mxu0 0.0
    %692 = vmatpush1.msra.mxu0 %v598
    %693 = vmatprep.subr.mxu0 0.0
    %694 = vmatpush1.msra.mxu0 %v599
    %695 = vmatprep.subr.mxu0 0.0
    %696 = vmatpush1.msra.mxu0 %v600
    %697 = vmatprep.subr.mxu0 0.0
    %698 = vmatpush1.msra.mxu0 %v601
    %699 = vmatprep.subr.mxu0 0.0
    %700 = vmatpush1.msra.mxu0 %v602
    %701 = vmatprep.subr.mxu0 0.0
    %702 = vmatpush1.msra.mxu0 %v603
    %703 = vmatprep.subr.mxu0 0.0
    %704 = vmatpush1.msra.mxu0 %v604
    %705 = vmatprep.subr.mxu0 0.0
    %706 = vmatpush1.msra.mxu0 %v605
    %707 = vmatprep.subr.mxu0 0.0
    %708 = vmatpush1.msra.mxu0 %v606
    %709 = vmatprep.subr.mxu0 0.0
    %710 = vmatpush1.msra.mxu0 %v607
    %711 = vmatprep.subr.mxu0 0.0
    %712 = vmatpush1.msra.mxu0 %v608
    %713 = vmatprep.subr.mxu0 0.0
    %714 = vmatpush1.msra.mxu0 %v609
    %715 = vmatprep.subr.mxu0 0.0
    %716 = vmatpush1.msra.mxu0 %v610
    %717 = vmatprep.subr.mxu0 0.0
    %718 = vmatpush1.msra.mxu0 %v611
    %719 = vmatprep.subr.mxu0 0.0
    %720 = vmatpush1.msra.mxu0 %v612
    %721 = vmatprep.subr.mxu0 0.0
    %722 = vmatpush1.msra.mxu0 %v613
    %723 = vmatprep.subr.mxu0 0.0
    %724 = vmatpush1.msra.mxu0 0.0
    %725 = vmatprep.subr.mxu0 0.0
    %726 = vmatpush1.msra.mxu0 0.0
    %727 = vmatprep.subr.mxu0 0.0
    %728 = vmatpush1.msra.mxu0 0.0
    %729 = vmatprep.subr.mxu0 0.0
    %730 = vmatpush1.msra.mxu0 0.0
    %731 = vmatprep.subr.mxu0 0.0
    %732 = vmatpush1.msra.mxu0 0.0
    %733 = vmatprep.subr.mxu0 0.0
    %734 = vmatpush1.msra.mxu0 0.0
    %735 = vmatprep.subr.mxu0 0.0
    %736 = vmatpush1.msra.mxu0 0.0
    %737 = vmatprep.subr.mxu0 0.0
    %738 = vmatpush1.msra.mxu0 0.0
    %739 = vmatprep.subr.mxu0 0.0
    %740 = vmatpush1.msra.mxu0 0.0
    %741 = vmatprep.subr.mxu0 0.0
    %742 = vmatpush1.msra.mxu0 0.0
    %743 = vmatprep.subr.mxu0 0.0
    %744 = vmatpush1.msra.mxu0 0.0
    %745 = vmatprep.subr.mxu0 0.0
    %746 = vmatpush1.msra.mxu0 0.0
    %747 = vmatprep.subr.mxu0 0.0
    %748 = vmatpush1.msra.mxu0 0.0
    %749 = vmatprep.subr.mxu0 0.0
    %750 = vmatpush1.msra.mxu0 0.0
    %751 = vmatprep.subr.mxu0 0.0
    %752 = vmatpush1.msra.mxu0 0.0
    %753 = vmatprep.subr.mxu0 0.0
    %754 = vmatpush1.msra.mxu0 0.0
    %755 = vmatprep.mubr.f32.mxu0 0.0
    %756 = vmatmul.mubr.f32.gmra.mrb[0].mxu0 %v460
    %v757 = vpop.f32.mrb[0].mxu0
    %v758 = vadd.f32 %v688, %v757
    %v759 = vpop.f32.mrb[0].mxu0
    %760 = vdwg.mxu0
    %vm761 = vcmask 64512
    %v762 = vsel %vm761, %v758, -inf
    %763 = vmax.xlane.f32.xlu0 %v762
    %v764 = vpop.xlane.xlu0 %763
    %v765 = vsub.f32 %v758, %v764
    %v766 = vmul.f32 %v765, 1.442695
    %v767 = vpow.pop %v766
    %v768 = vsel %vm761, %v767, 0.0
    %769 = vadd.xlane.f32.xlu0 %v768
    %v770 = vpop.xlane.xlu0 %769
    %v771 = vrcp.pop %v770
    %v772 = vmul.f32 %v767, %v771
    %vm773 = vcmask 80896
    %774 = vst.msk [vmem:[#allocation8] sm:$0xff] %vm773, %v758
    %775 = vst.msk [vmem:[#allocation8] sm:$0xff] %vm761, %v772
    // Predicated region
    $region50: #{tpu_custom_call.1} parent=1 // pred_check
      _
    $region51: #{tpu_custom_call.1} parent=1 // pred_check_branch
      %777 = sbr.rel (0) target = $region53
    $region52: #{tpu_custom_call.1} parent=1 // pred_region
      %s779 = ssub.s32 256, 256
      %780 = vsyncadd [#allocation4], %s779
      %s782 = sshll.u32 [#allocation7], 4
      %s783 = int_to_ptr.vmem [resolvable:$true] %s782
      %785 = dma.vmem_to_hbm [thread:$0]  %s783, 256, %s10, [#allocation4]
    $region53: #{tpu_custom_call.1} parent=1 // pred_fallthru
      _
    // Predicated region
    $region54: #{tpu_custom_call.1} parent=1 // pred_check
      _
    $region55: #{tpu_custom_call.1} parent=1 // pred_check_branch
      %787 = sbr.rel (0) target = $region57
    $region56: #{tpu_custom_call.1} parent=1 // pred_region
      %s789 = ssub.s32 128, 128
      %790 = vsyncadd [#allocation9], %s789
      %s792 = sshll.u32 [#allocation8], 4
      %s793 = int_to_ptr.vmem [resolvable:$true] %s792
      %795 = dma.vmem_to_hbm [thread:$0]  %s793, 128, %s11, [#allocation9]
    $region57: #{tpu_custom_call.1} parent=1 // pred_fallthru
      _
    // Predicated region
    $region58: #{tpu_custom_call.1} parent=1 // pred_check
      _
    $region59: #{tpu_custom_call.1} parent=1 // pred_check_branch
      %797 = sbr.rel (0) target = $region61
    $region60: #{tpu_custom_call.1} parent=1 // pred_region
      %798 = dma.done [#allocation4], 256
    $region61: #{tpu_custom_call.1} parent=1 // pred_fallthru
      _
    // Predicated region
    $region62: #{tpu_custom_call.1} parent=1 // pred_check
      _
    $region63: #{tpu_custom_call.1} parent=1 // pred_check_branch
      %800 = sbr.rel (0) target = $region65
    $region64: #{tpu_custom_call.1} parent=1 // pred_region
      %801 = dma.done [#allocation9], 128
    $region65: #{tpu_custom_call.1} parent=1 // pred_fallthru
      _
    %802 = vsyncpa [#allocation3], 1
    %803 = vsyncpa [#allocation6], 1
    %804 = vsyncpa [#allocation4], 1
    %805 = vsyncpa [#allocation9], 1

</llo_original>
